<compile_context>
chip_gen: v7x
topology: tpu7x:2x2x1
jax: 0.10.0
libtpu: 0.0.40
codegen_flags: <defaults>
</compile_context>

<pallas_src>
import functools

import jax
import jax.numpy as jnp
import numpy as np
from jax.experimental import pallas as pl
from jax.experimental.pallas import tpu as pltpu

_MIB = 1024 * 1024


# ---------------------------------------------------------------------------
# Chip introspection / blocking policy (generation-aware).
# ---------------------------------------------------------------------------
def _chip_info():
    """(physical VMEM bytes per TensorCore, TensorCores per chip), with fallbacks."""
    vmem_bytes = 128 * _MIB           # v5e / v6e physical
    num_tc = 1
    try:
        info = pltpu.get_tpu_info()
        vmem_bytes = int(getattr(info, "vmem_capacity_bytes", vmem_bytes))
    except Exception:
        pass
    try:
        if "v7" in jax.devices()[0].device_kind.lower():
            num_tc = 2                # v7x: 2 TensorCores per chip
    except Exception:
        pass
    if vmem_bytes <= 64 * _MIB:       # v7x-class VMEM
        num_tc = max(num_tc, 2)
    return vmem_bytes, num_tc


def _vmem_limit(vmem_phys, num_tc):
    """Scoped VMEM limit: ~96 MiB on 128-MiB chips (v5e/v6e), <=48 MiB on v7x."""
    limit = min(96 * _MIB, (vmem_phys * 3) // 4)
    if num_tc >= 2:
        limit = min(limit, 48 * _MIB)
    return int(max(limit, 8 * _MIB))


def _pick_batch_block(n, bytes_per_batch_elem, budget_bytes, num_tc):
    """Largest divisor nb of n whose block fits the budget; 0 if even nb=1 does
    not fit (caller uses the HW-tiled path).  On multi-TC chips keep >=2 grid
    steps per core so both cores get work and the DMA pipeline can overlap."""
    cap = budget_bytes // bytes_per_batch_elem
    if cap < 1:
        return 0
    if num_tc >= 2:
        target_steps = 2 * num_tc          # >= 2 steps per TensorCore
        if n >= target_steps:
            cap = min(cap, n // target_steps)
        elif n >= num_tc:
            cap = min(cap, n // num_tc)
    cap = int(max(1, min(cap, n)))
    for nb in range(cap, 0, -1):
        if n % nb == 0:
            return nb
    return 1


def _pick_hw_tile(hw, c, itemsize, budget_bytes):
    """Largest divisor of hw fitting the budget, preferring lane-dense
    (multiple-of-128) tiles so stores stay unmasked."""
    per_lane = c * (4 * itemsize + 4)      # in x2 + out x2 + one f32 temp
    cap = int(min(max(1, budget_bytes // per_lane), hw))
    divisors = [t for t in range(1, cap + 1) if hw % t == 0]
    lane_aligned = [t for t in divisors if t % 128 == 0]
    return max(lane_aligned) if lane_aligned else max(divisors)


# ---------------------------------------------------------------------------
# Kernels.
# ---------------------------------------------------------------------------
def _group_bn_fused_kernel(x_ref, gdown_ref, gup_ref, wb_ref, o_ref, *,
                           n_per_group, eps):
    """Single-slab path: normalize nb whole batch elements per grid step.

    x_ref (nb, C, HW) native dtype | gdown (C, G) f32 | gup (G, C) f32
    wb_ref (2, C) f32 weight/bias  | o_ref (nb, C, HW) native dtype
    """
    x = x_ref[...]                                  # native dtype (bf16 stays bf16)
    nb = x.shape[0]
    x32 = x.astype(jnp.float32)                     # f32 only for the stats sweep

    # One-pass statistics: per-channel sum and sum-of-squares in a single sweep.
    ch_sum = jnp.sum(x32, axis=-1)                  # (nb, C)
    ch_ss = jnp.sum(x32 * x32, axis=-1)             # (nb, C)

    # Group-aggregate + broadcast back with two tiny one-hot matmuls; the two
    # statistics are stacked so the MXU weights are pushed once per step.
    stats = jnp.concatenate([ch_sum, ch_ss], axis=0)                          # (2nb, C)
    grp = jnp.dot(stats, gdown_ref[...], preferred_element_type=jnp.float32)  # (2nb, G)
    back = jnp.dot(grp, gup_ref[...], preferred_element_type=jnp.float32)     # (2nb, C)
    sum_c, ss_c = back[:nb], back[nb:]

    inv_n = 1.0 / n_per_group
    inv_nm1 = 1.0 / (n_per_group - 1)               # unbiased (torch.std); wrapper asserts n>1
    mean_c = sum_c * inv_n                          # (nb, C)
    # Clamp guards tiny negative values from E[x^2]-mean^2 cancellation.
    var_c = jnp.maximum((ss_c - n_per_group * mean_c * mean_c) * inv_nm1, 0.0)
    # eps is added to *std* (exactly the PyTorch module).  approx=False keeps
    # full f32 accuracy; only (nb, C) values, so the EUP approx path buys nothing.
    inv_std_c = pl.reciprocal(jnp.sqrt(var_c) + eps, approx=False)

    w = wb_ref[0, :]
    b = wb_ref[1, :]
    scale_c = inv_std_c * w[None, :]                # (nb, C)
    shift_c = b[None, :] - mean_c * scale_c         # (nb, C)

    # Final normalize: one FMA sweep in the input's native dtype (bf16 FMA on
    # v6e/v7x).  scale/shift are only (nb, C) so their casts are negligible.
    scale = scale_c.astype(x.dtype)[:, :, None]
    shift = shift_c.astype(x.dtype)[:, :, None]
    o_ref[...] = (x * scale + shift).astype(o_ref.dtype)


def _stats_kernel(x_ref, stat_ref):
    """HW-tiled path, pass 1: accumulate per-(n, c) sum / sum-sq over HW tiles.

    grid = (N, HW//thw); the HW axis (last, 'arbitrary') reduces into the
    resident (2, 1, C) output block (constant block index along that axis).
    """
    @pl.when(pl.program_id(1) == 0)
    def _init():
        stat_ref[...] = jnp.zeros_like(stat_ref)

    x = x_ref[...].astype(jnp.float32)              # (1, C, thw)
    stat_ref[...] += jnp.stack(
        [jnp.sum(x, axis=-1), jnp.sum(x * x, axis=-1)], axis=0)  # (2, 1, C)


def _norm_kernel(x_ref, scale_ref, shift_ref, o_ref):
    """HW-tiled path, pass 2: lane-dense FMA normalize in native dtype."""
    x = x_ref[...]                                  # (1, C, thw)
    scale = scale_ref[...].astype(x.dtype)[:, :, None]
    shift = shift_ref[...].astype(x.dtype)[:, :, None]
    o_ref[...] = (x * scale + shift).astype(o_ref.dtype)


# ---------------------------------------------------------------------------
# pallas_call wrappers.
# ---------------------------------------------------------------------------
def _single_slab_call(x3, gdown, gup, wb, *, nb, n_per_group, eps, vmem_limit,
                      single_buffer_consts):
    N, C, HW = x3.shape
    G = gdown.shape[1]
    kernel = functools.partial(_group_bn_fused_kernel,
                               n_per_group=n_per_group, eps=eps)

    def const_spec(shape):
        imap = lambda *_: (0,) * len(shape)
        if single_buffer_consts:
            # Constant-index input: keep it VMEM-resident with a single buffer
            # instead of the default double buffering.
            return pl.BlockSpec(shape, imap, pipeline_mode=pl.Buffered(1))
        return pl.BlockSpec(shape, imap)

    itemsize = jnp.dtype(x3.dtype).itemsize
    cost = pl.CostEstimate(
        flops=5 * N * C * HW + 8 * N * C * G + 8 * N * C,
        transcendentals=2 * N * C,
        bytes_accessed=2 * N * C * HW * itemsize + (2 * C * G + 2 * C) * 4,
    )
    return pl.pallas_call(
        kernel,
        out_shape=jax.ShapeDtypeStruct((N, C, HW), x3.dtype),
        grid=(N // nb,),
        in_specs=[
            pl.BlockSpec((nb, C, HW), lambda i: (i, 0, 0)),
            const_spec((C, G)),
            const_spec((G, C)),
            const_spec((2, C)),
        ],
        out_specs=pl.BlockSpec((nb, C, HW), lambda i: (i, 0, 0)),
        compiler_params=pltpu.CompilerParams(
            dimension_semantics=("parallel",),
            vmem_limit_bytes=vmem_limit,
        ),
        cost_estimate=cost,
    )(x3, gdown, gup, wb)


def _hw_tiled_call(x3, w, b, group_num, cg, n_per_group, eps, vmem_limit, thw):
    N, C, HW = x3.shape
    G = group_num
    hw_steps = HW // thw

    # Pass 1: per-(n, c) sum / sum-of-squares, HW-tiled reduction.
    stats = pl.pallas_call(
        _stats_kernel,
        out_shape=jax.ShapeDtypeStruct((2, N, C), jnp.float32),
        grid=(N, hw_steps),
        in_specs=[pl.BlockSpec((1, C, thw), lambda i, j: (i, 0, j))],
        out_specs=pl.BlockSpec((2, 1, C), lambda i, j: (0, i, 0)),
        compiler_params=pltpu.CompilerParams(
            dimension_semantics=("parallel", "arbitrary"),
            vmem_limit_bytes=vmem_limit,
        ),
    )(x3)

    # Tiny (N, G)/(N, C) math: group mean / unbiased std / folded affine.
    ch_sum, ch_ss = stats[0], stats[1]
    grp_sum = ch_sum.reshape(N, G, cg).sum(axis=-1)
    grp_ss = ch_ss.reshape(N, G, cg).sum(axis=-1)
    mean = grp_sum / n_per_group
    var = jnp.maximum((grp_ss - n_per_group * mean * mean) / (n_per_group - 1), 0.0)
    inv_std = 1.0 / (jnp.sqrt(var) + eps)           # eps on std (module semantics)
    mean_c = jnp.repeat(mean, cg, axis=1)           # (N, C)
    scale_c = jnp.repeat(inv_std, cg, axis=1) * w[None, :]
    shift_c = b[None, :] - mean_c * scale_c

    # Pass 2: lane-dense normalize, one FMA sweep per tile in native dtype.
    return pl.pallas_call(
        _norm_kernel,
        out_shape=jax.ShapeDtypeStruct((N, C, HW), x3.dtype),
        grid=(N, hw_steps),
        in_specs=[
            pl.BlockSpec((1, C, thw), lambda i, j: (i, 0, j)),
            pl.BlockSpec((1, C), lambda i, j: (i, 0)),
            pl.BlockSpec((1, C), lambda i, j: (i, 0)),
        ],
        out_specs=pl.BlockSpec((1, C, thw), lambda i, j: (i, 0, j)),
        compiler_params=pltpu.CompilerParams(
            dimension_semantics=("parallel", "parallel"),
            vmem_limit_bytes=vmem_limit,
        ),
    )(x3, scale_c, shift_c)


def group_batchnorm2d(x, weight, bias, *, group_num=16, eps=1e-10,
                      _force_tiled=False, _force_hw_tile=None):
    """Forward of GroupBatchnorm2d (per-sample group stats; train == eval).

    x: (N, C, H, W); weight/bias: (C,) or (C, 1, 1).  Returns (N, C, H, W).
    """
    N, C, H, W = x.shape
    assert C >= group_num and C % group_num == 0
    HW = H * W
    cg = C // group_num
    n_per_group = cg * HW
    # torch.std over a single element is 0/0; require a sane group size.
    assert n_per_group > 1, "GroupBatchnorm2d needs >1 element per group"

    # Lane-dense layout: H*W on lanes, C on sublanes.  Contiguous reshape ->
    # free in HBM.  (If HW is far from a 128 multiple the lane dim pads and
    # stores become masked; nothing better exists for this layout.)
    x3 = x.reshape(N, C, HW)
    w = weight.reshape(C).astype(jnp.float32)
    b = bias.reshape(C).astype(jnp.float32)

    vmem_phys, num_tc = _chip_info()
    vmem_limit = _vmem_limit(vmem_phys, num_tc)
    itemsize = jnp.dtype(x.dtype).itemsize

    const_bytes = 2 * (2 * C * group_num + 2 * C) * 4   # worst case (double-buffered)
    budget = max(vmem_limit - const_bytes - 2 * _MIB, 1 * _MIB)

    # in x2 (double buffer) + out x2 + f32 temporaries for the stats sweep.
    per_batch_elem = C * HW * (4 * itemsize + 8)
    nb = 0 if _force_tiled else _pick_batch_block(N, per_batch_elem, budget, num_tc)

    if nb > 0:
        # Whole (nb, C, HW) slab per grid step: x is read once and written once.
        ch_group = jnp.arange(C, dtype=jnp.int32) // cg
        grp_ids = jnp.arange(group_num, dtype=jnp.int32)
        gdown = (ch_group[:, None] == grp_ids[None, :]).astype(jnp.float32)   # (C, G)
        gup = (grp_ids[:, None] == ch_group[None, :]).astype(jnp.float32)     # (G, C)
        wb = jnp.stack([w, b], axis=0)                                        # (2, C)
        try:
            out = _single_slab_call(x3, gdown, gup, wb, nb=nb,
                                    n_per_group=n_per_group, eps=eps,
                                    vmem_limit=vmem_limit,
                                    single_buffer_consts=True)
        except Exception:
            # pipeline_mode=pl.Buffered(1) unsupported on this jax version:
            # fall back to default double-buffered constants (tiny cost).
            out = _single_slab_call(x3, gdown, gup, wb, nb=nb,
                                    n_per_group=n_per_group, eps=eps,
                                    vmem_limit=vmem_limit,
                                    single_buffer_consts=False)
    else:
        # HW-tiled fallback: the slab does not fit VMEM (large feature maps /
        # v7x's 64 MiB).  Costs one extra read of x (stats pass + norm pass).
        thw = (_force_hw_tile if _force_hw_tile is not None
               else _pick_hw_tile(HW, C, itemsize, budget))
        assert HW % thw == 0
        out = _hw_tiled_call(x3, w, b, group_num, cg, n_per_group, eps,
                             vmem_limit, thw)

    return out.reshape(N, C, H, W)


def _reference(x, weight, bias, group_num, eps):
    """Pure-JAX reference of the PyTorch forward (torch.std is unbiased)."""
    N, C, H, W = x.shape
    xg = x.reshape(N, group_num, -1).astype(jnp.float32)
    mean = jnp.mean(xg, axis=2, keepdims=True)
    std = jnp.sqrt(jnp.var(xg, axis=2, keepdims=True, ddof=1))
    xn = ((xg - mean) / (std + eps)).reshape(N, C, H, W)
    return xn * weight.reshape(1, C, 1, 1) + bias.reshape(1, C, 1, 1)


if __name__ == "__main__":
    N, C, H, W = 2, 16, 16, 16
    G = 4
    EPS = 1e-10

    key = jax.random.PRNGKey(0)
    kx, kw, kb = jax.random.split(key, 3)
    x = jax.random.normal(kx, (N, C, H, W), dtype=jnp.float32)
    weight = jax.random.normal(kw, (C, 1, 1), dtype=jnp.float32)      # torch.randn init
    bias = 0.1 * jax.random.normal(kb, (C, 1, 1), dtype=jnp.float32)  # nonzero to exercise the path

    ref = _reference(x, weight, bias, G, EPS)

    # 1) Main single-slab path (f32).
    out = jax.block_until_ready(
        group_batchnorm2d(x, weight, bias, group_num=G, eps=EPS))
    np.testing.assert_allclose(np.asarray(out), np.asarray(ref), atol=1e-4, rtol=1e-4)
    assert out.shape == (N, C, H, W)

    # 2) HW-tiled fallback path (forced), same numerics.
    out_t = jax.block_until_ready(
        group_batchnorm2d(x, weight, bias, group_num=G, eps=EPS,
                          _force_tiled=True, _force_hw_tile=128))
    np.testing.assert_allclose(np.asarray(out_t), np.asarray(ref), atol=1e-4, rtol=1e-4)

    # 3) bf16 smoke test: stats stay in f32, final FMA runs in bf16
    #    (loose tolerance: bf16 output quantization).
    xb = x.astype(jnp.bfloat16)
    out_b = jax.block_until_ready(
        group_batchnorm2d(xb, weight, bias, group_num=G, eps=EPS))
    ref_b = _reference(xb, weight, bias, G, EPS)
    np.testing.assert_allclose(np.asarray(out_b.astype(jnp.float32)),
                               np.asarray(ref_b), atol=1e-1, rtol=5e-2)

    print("KERNEL_OK")
</pallas_src>

<mosaic_0001>
module attributes {stable_mosaic.version = 11 : i64} {
  func.func @_group_bn_fused_kernel(%arg0: i32, %arg1: memref<2x16x256xf32, #tpu.memory_space<vmem>>, %arg2: memref<16x4xf32, #tpu.memory_space<vmem>>, %arg3: memref<4x16xf32, #tpu.memory_space<vmem>>, %arg4: memref<2x16xf32, #tpu.memory_space<vmem>>, %arg5: memref<2x16x256xf32, #tpu.memory_space<vmem>>) attributes {dimension_semantics = [#tpu.dimension_semantics<parallel>], iteration_bounds = array<i64: 1>, scalar_prefetch = 0 : i64, scratch_operands = 0 : i64, tpu.core_type = #tpu.core_type<tc>, window_params = [{transform_indices = @transform_0, window_bounds = array<i64: 2, 16, 256>}, {pipeline_mode = #tpu.pipeline_mode<synchronous>, transform_indices = @transform_1, window_bounds = array<i64: 16, 4>}, {pipeline_mode = #tpu.pipeline_mode<synchronous>, transform_indices = @transform_2, window_bounds = array<i64: 4, 16>}, {pipeline_mode = #tpu.pipeline_mode<synchronous>, transform_indices = @transform_3, window_bounds = array<i64: 2, 16>}, {transform_indices = @transform_4, window_bounds = array<i64: 2, 16, 256>}]} {
    %c0 = arith.constant 0 : index
    %c0_0 = arith.constant 0 : index
    %c0_1 = arith.constant 0 : index
    %0 = vector.load %arg1[%c0, %c0_0, %c0_1] : memref<2x16x256xf32, #tpu.memory_space<vmem>>, vector<2x16x256xf32>
    %cst = arith.constant dense<0.000000e+00> : vector<2x16xf32>
    %1 = vector.multi_reduction <add>, %0, %cst [2] : vector<2x16x256xf32> to vector<2x16xf32>
    %2 = arith.mulf %0, %0 : vector<2x16x256xf32>
    %cst_2 = arith.constant dense<0.000000e+00> : vector<2x16xf32>
    %3 = vector.multi_reduction <add>, %2, %cst_2 [2] : vector<2x16x256xf32> to vector<2x16xf32>
    %4 = tpu.concatenate %1, %3 in 0 : vector<2x16xf32>, vector<2x16xf32> -> vector<4x16xf32>
    %c0_3 = arith.constant 0 : index
    %c0_4 = arith.constant 0 : index
    %5 = vector.load %arg2[%c0_3, %c0_4] : memref<16x4xf32, #tpu.memory_space<vmem>>, vector<16x4xf32>
    %cst_5 = arith.constant dense<0.000000e+00> : vector<4x4xf32>
    %6 = tpu.matmul %4, %5, %cst_5 {dimension_numbers = #tpu.dot_dimension_numbers<[1], [0], [0], [1], [0, 0, 1, 1], [], []>} : vector<4x16xf32>, vector<16x4xf32>, vector<4x4xf32> -> vector<4x4xf32>
    %c0_6 = arith.constant 0 : index
    %c0_7 = arith.constant 0 : index
    %7 = vector.load %arg3[%c0_6, %c0_7] : memref<4x16xf32, #tpu.memory_space<vmem>>, vector<4x16xf32>
    %cst_8 = arith.constant dense<0.000000e+00> : vector<4x16xf32>
    %8 = tpu.matmul %6, %7, %cst_8 {dimension_numbers = #tpu.dot_dimension_numbers<[1], [0], [0], [1], [0, 0, 1, 1], [], []>} : vector<4x4xf32>, vector<4x16xf32>, vector<4x16xf32> -> vector<4x16xf32>
    %9 = vector.extract_strided_slice %8 {offsets = [0, 0], sizes = [2, 16], strides = [1, 1]} : vector<4x16xf32> to vector<2x16xf32>
    %10 = vector.extract_strided_slice %8 {offsets = [2, 0], sizes = [2, 16], strides = [1, 1]} : vector<4x16xf32> to vector<2x16xf32>
    %cst_9 = arith.constant 9.765625E-4 : f32
    %11 = vector.broadcast %cst_9 : f32 to vector<2x16xf32>
    %12 = arith.mulf %9, %11 : vector<2x16xf32>
    %cst_10 = arith.constant 1.024000e+03 : f32
    %13 = vector.broadcast %cst_10 : f32 to vector<2x16xf32>
    %14 = arith.mulf %13, %12 : vector<2x16xf32>
    %15 = arith.mulf %14, %12 : vector<2x16xf32>
    %16 = arith.subf %10, %15 : vector<2x16xf32>
    %cst_11 = arith.constant 9.77517105E-4 : f32
    %17 = vector.broadcast %cst_11 : f32 to vector<2x16xf32>
    %18 = arith.mulf %16, %17 : vector<2x16xf32>
    %cst_12 = arith.constant 0.000000e+00 : f32
    %19 = vector.broadcast %cst_12 : f32 to vector<2x16xf32>
    %20 = arith.maximumf %18, %19 : vector<2x16xf32>
    %21 = math.sqrt %20 : vector<2x16xf32>
    %cst_13 = arith.constant 1.000000e-10 : f32
    %22 = vector.broadcast %cst_13 : f32 to vector<2x16xf32>
    %23 = arith.addf %21, %22 : vector<2x16xf32>
    %24 = tpu.reciprocal %23 : vector<2x16xf32> -> vector<2x16xf32>
    %c0_14 = arith.constant 0 : index
    %c0_15 = arith.constant 0 : index
    %25 = vector.load %arg4[%c0_14, %c0_15] : memref<2x16xf32, #tpu.memory_space<vmem>>, vector<1x16xf32>
    %26 = vector.shape_cast %25 : vector<1x16xf32> to vector<16xf32>
    %c1 = arith.constant 1 : index
    %c0_16 = arith.constant 0 : index
    %27 = vector.load %arg4[%c1, %c0_16] : memref<2x16xf32, #tpu.memory_space<vmem>>, vector<1x16xf32>
    %28 = vector.shape_cast %27 : vector<1x16xf32> to vector<16xf32>
    %29 = vector.shape_cast %26 : vector<16xf32> to vector<1x16xf32>
    %30 = vector.broadcast %29 : vector<1x16xf32> to vector<2x16xf32>
    %31 = arith.mulf %24, %30 : vector<2x16xf32>
    %32 = vector.shape_cast %28 : vector<16xf32> to vector<1x16xf32>
    %33 = arith.mulf %12, %31 : vector<2x16xf32>
    %34 = vector.broadcast %32 : vector<1x16xf32> to vector<2x16xf32>
    %35 = arith.subf %34, %33 : vector<2x16xf32>
    %36 = vector.shape_cast %31 : vector<2x16xf32> to vector<2x16x1xf32>
    %37 = vector.shape_cast %35 : vector<2x16xf32> to vector<2x16x1xf32>
    %38 = vector.broadcast %36 : vector<2x16x1xf32> to vector<2x16x256xf32>
    %39 = arith.mulf %0, %38 : vector<2x16x256xf32>
    %40 = vector.broadcast %37 : vector<2x16x1xf32> to vector<2x16x256xf32>
    %41 = arith.addf %39, %40 : vector<2x16x256xf32>
    %c0_17 = arith.constant 0 : index
    %c0_18 = arith.constant 0 : index
    %c0_19 = arith.constant 0 : index
    %42 = vector.load %arg5[%c0_17, %c0_18, %c0_19] : memref<2x16x256xf32, #tpu.memory_space<vmem>>, vector<2x16x256xf32>
    tpu.vector_store %arg5[%c0_17, %c0_18, %c0_19], %41 {strides = array<i32>} : memref<2x16x256xf32, #tpu.memory_space<vmem>>, vector<2x16x256xf32>,
    return
  }
  func.func @transform_0(%arg0: i32) -> (i32, i32, i32) {
    %c0_i32 = arith.constant 0 : i32
    %c0_i32_0 = arith.constant 0 : i32
    %c0_i32_1 = arith.constant 0 : i32
    return %arg0, %c0_i32, %c0_i32_0 : i32, i32, i32
  }
  func.func @transform_1(%arg0: i32) -> (i32, i32) {
    %c0_i32 = arith.constant 0 : i32
    %c0_i32_0 = arith.constant 0 : i32
    %c0_i32_1 = arith.constant 0 : i32
    return %c0_i32, %c0_i32_0 : i32, i32
  }
  func.func @transform_2(%arg0: i32) -> (i32, i32) {
    %c0_i32 = arith.constant 0 : i32
    %c0_i32_0 = arith.constant 0 : i32
    %c0_i32_1 = arith.constant 0 : i32
    return %c0_i32, %c0_i32_0 : i32, i32
  }
  func.func @transform_3(%arg0: i32) -> (i32, i32) {
    %c0_i32 = arith.constant 0 : i32
    %c0_i32_0 = arith.constant 0 : i32
    %c0_i32_1 = arith.constant 0 : i32
    return %c0_i32, %c0_i32_0 : i32, i32
  }
  func.func @transform_4(%arg0: i32) -> (i32, i32, i32) {
    %c0_i32 = arith.constant 0 : i32
    %c0_i32_0 = arith.constant 0 : i32
    %c0_i32_1 = arith.constant 0 : i32
    return %arg0, %c0_i32, %c0_i32_0 : i32, i32, i32
  }
}

module attributes {stable_mosaic.version = 11 : i64} {
  func.func @_group_bn_fused_kernel(%arg0: i32, %arg1: memref<2x16x256xf32, #tpu.memory_space<vmem>>, %arg2: memref<16x4xf32, #tpu.memory_space<vmem>>, %arg3: memref<4x16xf32, #tpu.memory_space<vmem>>, %arg4: memref<2x16xf32, #tpu.memory_space<vmem>>, %arg5: memref<2x16x256xf32, #tpu.memory_space<vmem>>) attributes {dimension_semantics = [#tpu.dimension_semantics<parallel>], iteration_bounds = array<i64: 1>, scalar_prefetch = 0 : i64, scratch_operands = 0 : i64, tpu.core_type = #tpu.core_type<tc>, window_params = [{transform_indices = @transform_0, window_bounds = array<i64: 2, 16, 256>}, {pipeline_mode = #tpu.pipeline_mode<synchronous>, transform_indices = @transform_1, window_bounds = array<i64: 16, 4>}, {pipeline_mode = #tpu.pipeline_mode<synchronous>, transform_indices = @transform_2, window_bounds = array<i64: 4, 16>}, {pipeline_mode = #tpu.pipeline_mode<synchronous>, transform_indices = @transform_3, window_bounds = array<i64: 2, 16>}, {transform_indices = @transform_4, window_bounds = array<i64: 2, 16, 256>}]} {
    %c0 = arith.constant 0 : index
    %c0_0 = arith.constant 0 : index
    %c0_1 = arith.constant 0 : index
    %0 = vector.load %arg1[%c0, %c0_0, %c0_1] : memref<2x16x256xf32, #tpu.memory_space<vmem>>, vector<2x16x256xf32>
    %cst = arith.constant dense<0.000000e+00> : vector<2x16xf32>
    %1 = vector.multi_reduction <add>, %0, %cst [2] : vector<2x16x256xf32> to vector<2x16xf32>
    %2 = arith.mulf %0, %0 : vector<2x16x256xf32>
    %cst_2 = arith.constant dense<0.000000e+00> : vector<2x16xf32>
    %3 = vector.multi_reduction <add>, %2, %cst_2 [2] : vector<2x16x256xf32> to vector<2x16xf32>
    %4 = tpu.concatenate %1, %3 in 0 : vector<2x16xf32>, vector<2x16xf32> -> vector<4x16xf32>
    %c0_3 = arith.constant 0 : index
    %c0_4 = arith.constant 0 : index
    %5 = vector.load %arg2[%c0_3, %c0_4] : memref<16x4xf32, #tpu.memory_space<vmem>>, vector<16x4xf32>
    %cst_5 = arith.constant dense<0.000000e+00> : vector<4x4xf32>
    %6 = tpu.matmul %4, %5, %cst_5 {dimension_numbers = #tpu.dot_dimension_numbers<[1], [0], [0], [1], [0, 0, 1, 1], [], []>} : vector<4x16xf32>, vector<16x4xf32>, vector<4x4xf32> -> vector<4x4xf32>
    %c0_6 = arith.constant 0 : index
    %c0_7 = arith.constant 0 : index
    %7 = vector.load %arg3[%c0_6, %c0_7] : memref<4x16xf32, #tpu.memory_space<vmem>>, vector<4x16xf32>
    %cst_8 = arith.constant dense<0.000000e+00> : vector<4x16xf32>
    %8 = tpu.matmul %6, %7, %cst_8 {dimension_numbers = #tpu.dot_dimension_numbers<[1], [0], [0], [1], [0, 0, 1, 1], [], []>} : vector<4x4xf32>, vector<4x16xf32>, vector<4x16xf32> -> vector<4x16xf32>
    %9 = vector.extract_strided_slice %8 {offsets = [0, 0], sizes = [2, 16], strides = [1, 1]} : vector<4x16xf32> to vector<2x16xf32>
    %10 = vector.extract_strided_slice %8 {offsets = [2, 0], sizes = [2, 16], strides = [1, 1]} : vector<4x16xf32> to vector<2x16xf32>
    %cst_9 = arith.constant 9.765625E-4 : f32
    %11 = vector.broadcast %cst_9 : f32 to vector<2x16xf32>
    %12 = arith.mulf %9, %11 : vector<2x16xf32>
    %cst_10 = arith.constant 1.024000e+03 : f32
    %13 = vector.broadcast %cst_10 : f32 to vector<2x16xf32>
    %14 = arith.mulf %13, %12 : vector<2x16xf32>
    %15 = arith.mulf %14, %12 : vector<2x16xf32>
    %16 = arith.subf %10, %15 : vector<2x16xf32>
    %cst_11 = arith.constant 9.77517105E-4 : f32
    %17 = vector.broadcast %cst_11 : f32 to vector<2x16xf32>
    %18 = arith.mulf %16, %17 : vector<2x16xf32>
    %cst_12 = arith.constant 0.000000e+00 : f32
    %19 = vector.broadcast %cst_12 : f32 to vector<2x16xf32>
    %20 = arith.maximumf %18, %19 : vector<2x16xf32>
    %21 = math.sqrt %20 : vector<2x16xf32>
    %cst_13 = arith.constant 1.000000e-10 : f32
    %22 = vector.broadcast %cst_13 : f32 to vector<2x16xf32>
    %23 = arith.addf %21, %22 : vector<2x16xf32>
    %24 = tpu.reciprocal %23 : vector<2x16xf32> -> vector<2x16xf32>
    %c0_14 = arith.constant 0 : index
    %c0_15 = arith.constant 0 : index
    %25 = vector.load %arg4[%c0_14, %c0_15] : memref<2x16xf32, #tpu.memory_space<vmem>>, vector<1x16xf32>
    %26 = vector.shape_cast %25 : vector<1x16xf32> to vector<16xf32>
    %c1 = arith.constant 1 : index
    %c0_16 = arith.constant 0 : index
    %27 = vector.load %arg4[%c1, %c0_16] : memref<2x16xf32, #tpu.memory_space<vmem>>, vector<1x16xf32>
    %28 = vector.shape_cast %27 : vector<1x16xf32> to vector<16xf32>
    %29 = vector.shape_cast %26 : vector<16xf32> to vector<1x16xf32>
    %30 = vector.broadcast %29 : vector<1x16xf32> to vector<2x16xf32>
    %31 = arith.mulf %24, %30 : vector<2x16xf32>
    %32 = vector.shape_cast %28 : vector<16xf32> to vector<1x16xf32>
    %33 = arith.mulf %12, %31 : vector<2x16xf32>
    %34 = vector.broadcast %32 : vector<1x16xf32> to vector<2x16xf32>
    %35 = arith.subf %34, %33 : vector<2x16xf32>
    %36 = vector.shape_cast %31 : vector<2x16xf32> to vector<2x16x1xf32>
    %37 = vector.shape_cast %35 : vector<2x16xf32> to vector<2x16x1xf32>
    %38 = vector.broadcast %36 : vector<2x16x1xf32> to vector<2x16x256xf32>
    %39 = arith.mulf %0, %38 : vector<2x16x256xf32>
    %40 = vector.broadcast %37 : vector<2x16x1xf32> to vector<2x16x256xf32>
    %41 = arith.addf %39, %40 : vector<2x16x256xf32>
    %c0_17 = arith.constant 0 : index
    %c0_18 = arith.constant 0 : index
    %c0_19 = arith.constant 0 : index
    %42 = vector.load %arg5[%c0_17, %c0_18, %c0_19] : memref<2x16x256xf32, #tpu.memory_space<vmem>>, vector<2x16x256xf32>
    tpu.vector_store %arg5[%c0_17, %c0_18, %c0_19], %41 {strides = array<i32>} : memref<2x16x256xf32, #tpu.memory_space<vmem>>, vector<2x16x256xf32>,
    return
  }
  func.func @transform_0(%arg0: i32) -> (i32, i32, i32) {
    %c0_i32 = arith.constant 0 : i32
    %c0_i32_0 = arith.constant 0 : i32
    %c0_i32_1 = arith.constant 0 : i32
    return %arg0, %c0_i32, %c0_i32_0 : i32, i32, i32
  }
  func.func @transform_1(%arg0: i32) -> (i32, i32) {
    %c0_i32 = arith.constant 0 : i32
    %c0_i32_0 = arith.constant 0 : i32
    %c0_i32_1 = arith.constant 0 : i32
    return %c0_i32, %c0_i32_0 : i32, i32
  }
  func.func @transform_2(%arg0: i32) -> (i32, i32) {
    %c0_i32 = arith.constant 0 : i32
    %c0_i32_0 = arith.constant 0 : i32
    %c0_i32_1 = arith.constant 0 : i32
    return %c0_i32, %c0_i32_0 : i32, i32
  }
  func.func @transform_3(%arg0: i32) -> (i32, i32) {
    %c0_i32 = arith.constant 0 : i32
    %c0_i32_0 = arith.constant 0 : i32
    %c0_i32_1 = arith.constant 0 : i32
    return %c0_i32, %c0_i32_0 : i32, i32
  }
  func.func @transform_4(%arg0: i32) -> (i32, i32, i32) {
    %c0_i32 = arith.constant 0 : i32
    %c0_i32_0 = arith.constant 0 : i32
    %c0_i32_1 = arith.constant 0 : i32
    return %arg0, %c0_i32, %c0_i32_0 : i32, i32, i32
  }
}

</mosaic_0001>

<llo_original>
// kernel: tpu_custom_call.1
$region0: #{tpu_custom_call.1}
  #allocation0 [shape = 'u32[]', space=smem, size = 0x4, offset = 0x4, fixed_abs, tag = 'smem constant byte address 0x4 - core index']
  #allocation1 [shape = 'u32[144,128]{1,0:T(1,128)}', space=vmem, size = 0x12000, scoped, tag = 'internal scratch']
  %s0 = inlined_call_operand.hbm [shape: f32[2,16,256], index: 0, kind: input, shape index: {}]
  %s1 = inlined_call_operand.hbm [shape: f32[16,4], index: 1, kind: input, shape index: {}]
  %s2 = inlined_call_operand.hbm [shape: f32[4,16], index: 2, kind: input, shape index: {}]
  %s3 = inlined_call_operand.hbm [shape: f32[2,16], index: 3, kind: input, shape index: {}]
  %s4 = inlined_call_operand.hbm [shape: f32[2,16,256], index: 4, kind: output, shape index: {}]
  %s5 = sld [smem:[#allocation0]]
  $region42: #{tpu_custom_call.1} parent=0
    _
  %s7 = ssub.s32 1, %s5
  %s8 = scalar_select 0, %s7, %s5
  $region1: #{tpu_custom_call.1} parent=0
    #allocation2 [shape = 'u8[32768]{0}', space=vmem, size = 0x8000, scoped, tag = 'input window, operand 0, single buffered']
    #allocation3 [shape = 's32[1]{0}', space=sflag, size = 0x4, scoped, tag = 'scoped memory for tpu_custom_call.1']
    #allocation4 [shape = 's32[1]{0}', space=sflag, size = 0x4, scoped, tag = 'scoped memory for tpu_custom_call.1']
    #allocation5 [shape = 'u8[8192]{0}', space=vmem, size = 0x2000, scoped, tag = 'input window, operand 1, single buffered']
    #allocation6 [shape = 's32[1]{0}', space=sflag, size = 0x4, scoped, tag = 'scoped memory for tpu_custom_call.1']
    #allocation7 [shape = 'u8[2048]{0}', space=vmem, size = 0x800, scoped, tag = 'input window, operand 2, single buffered']
    #allocation8 [shape = 'u8[1024]{0}', space=vmem, size = 0x400, scoped, tag = 'input window, operand 3, single buffered']
    #allocation9 [shape = 's32[1]{0}', space=sflag, size = 0x4, scoped, tag = 'scoped memory for tpu_custom_call.1']
    #allocation10 [shape = 'u8[32768]{0}', space=vmem, size = 0x8000, scoped, tag = 'output window, operand 0, single buffered']
    %9 = vsyncpa [#allocation3], 0
    %10 = vsyncpa [#allocation6], 0
    %11 = vsyncpa [#allocation9], 0
    %12 = vsyncpa [#allocation4], 0
    // Predicated region
    $region2: #{tpu_custom_call.1} parent=1 // pred_check
      _
    $region3: #{tpu_custom_call.1} parent=1 // pred_check_branch
      %14 = sbr.rel (0) target = $region5
    $region4: #{tpu_custom_call.1} parent=1 // pred_region
      %s16 = ssub.s32 1024, 1024
      %17 = vsyncadd [#allocation3], %s16
      %s18 = sshll.u32 [#allocation2], 4
      %s19 = int_to_ptr.vmem [resolvable:$true] %s18
      %24 = dma.hbm_to_vmem [thread:$0]  %s0, 1024, %s19, [#allocation3], 256, 256, 16
    $region5: #{tpu_custom_call.1} parent=1 // pred_fallthru
      _
    // Predicated region
    $region6: #{tpu_custom_call.1} parent=1 // pred_check
      _
    $region7: #{tpu_custom_call.1} parent=1 // pred_check_branch
      %26 = sbr.rel (0) target = $region9
    $region8: #{tpu_custom_call.1} parent=1 // pred_region
      %s28 = ssub.s32 256, 256
      %29 = vsyncadd [#allocation6], %s28
      %s30 = sshll.u32 [#allocation5], 4
      %s31 = int_to_ptr.vmem [resolvable:$true] %s30
      %36 = dma.hbm_to_vmem [thread:$0]  %s1, 256, %s31, [#allocation6], 128, 128, 8
    $region9: #{tpu_custom_call.1} parent=1 // pred_fallthru
      _
    // Predicated region
    $region10: #{tpu_custom_call.1} parent=1 // pred_check
      _
    $region11: #{tpu_custom_call.1} parent=1 // pred_check_branch
      %38 = sbr.rel (0) target = $region13
    $region12: #{tpu_custom_call.1} parent=1 // pred_region
      %s40 = ssub.s32 64, 64
      %41 = vsyncadd [#allocation6], %s40
      %s43 = sshll.u32 [#allocation7], 4
      %s44 = int_to_ptr.vmem [resolvable:$true] %s43
      %46 = dma.hbm_to_vmem [thread:$0]  %s2, 64, %s44, [#allocation6]
    $region13: #{tpu_custom_call.1} parent=1 // pred_fallthru
      _
    // Predicated region
    $region14: #{tpu_custom_call.1} parent=1 // pred_check
      _
    $region15: #{tpu_custom_call.1} parent=1 // pred_check_branch
      %48 = sbr.rel (0) target = $region17
    $region16: #{tpu_custom_call.1} parent=1 // pred_region
      %s50 = ssub.s32 32, 32
      %51 = vsyncadd [#allocation9], %s50
      %s53 = sshll.u32 [#allocation8], 4
      %s54 = int_to_ptr.vmem [resolvable:$true] %s53
      %56 = dma.hbm_to_vmem [thread:$0]  %s3, 32, %s54, [#allocation9]
    $region17: #{tpu_custom_call.1} parent=1 // pred_fallthru
      _
    // Predicated region
    $region18: #{tpu_custom_call.1} parent=1 // pred_check
      _
    $region19: #{tpu_custom_call.1} parent=1 // pred_check_branch
      %58 = sbr.rel (0) target = $region21
    $region20: #{tpu_custom_call.1} parent=1 // pred_region
      %59 = dma.done [#allocation3], 1024
    $region21: #{tpu_custom_call.1} parent=1 // pred_fallthru
      _
    // Predicated region
    $region22: #{tpu_custom_call.1} parent=1 // pred_check
      _
    $region23: #{tpu_custom_call.1} parent=1 // pred_check_branch
      %61 = sbr.rel (0) target = $region25
    $region24: #{tpu_custom_call.1} parent=1 // pred_region
      %62 = dma.done [#allocation6], 256
    $region25: #{tpu_custom_call.1} parent=1 // pred_fallthru
      _
    // Predicated region
    $region26: #{tpu_custom_call.1} parent=1 // pred_check
      _
    $region27: #{tpu_custom_call.1} parent=1 // pred_check_branch
      %64 = sbr.rel (0) target = $region29
    $region28: #{tpu_custom_call.1} parent=1 // pred_region
      %65 = dma.done [#allocation6], 64
    $region29: #{tpu_custom_call.1} parent=1 // pred_fallthru
      _
    // Predicated region
    $region30: #{tpu_custom_call.1} parent=1 // pred_check
      _
    $region31: #{tpu_custom_call.1} parent=1 // pred_check_branch
      %67 = sbr.rel (0) target = $region33
    $region32: #{tpu_custom_call.1} parent=1 // pred_region
      %68 = dma.done [#allocation9], 32
    $region33: #{tpu_custom_call.1} parent=1 // pred_fallthru
      _
    %v69 = vld [vmem:[#allocation2] sm:$0xff]
    %v70 = vld [vmem:[#allocation2 + $0x8] sm:$0xff]
    %v71 = vld [vmem:[#allocation2 + $0x10] sm:$0xff]
    %v72 = vld [vmem:[#allocation2 + $0x18] sm:$0xff]
    %v73 = vld [vmem:[#allocation2 + $0x20] sm:$0xff]
    %v74 = vld [vmem:[#allocation2 + $0x28] sm:$0xff]
    %v75 = vld [vmem:[#allocation2 + $0x30] sm:$0xff]
    %v76 = vld [vmem:[#allocation2 + $0x38] sm:$0xff]
    %v77 = vadd.f32 %v69, %v70
    %78 = vadd.xlane.f32.xlu0 %v77
    %v79 = vpop.xlane.xlu0 %78
    %v80 = vadd.f32 %v71, %v72
    %81 = vadd.xlane.f32.xlu0 %v80
    %v82 = vpop.xlane.xlu0 %81
    %v83 = vadd.f32 %v73, %v74
    %84 = vadd.xlane.f32.xlu0 %v83
    %v85 = vpop.xlane.xlu0 %84
    %v86 = vadd.f32 %v75, %v76
    %87 = vadd.xlane.f32.xlu0 %v86
    %v88 = vpop.xlane.xlu0 %87
    %v89 = vmul.f32 %v69, %v69
    %v90 = vmul.f32 %v70, %v70
    %v91 = vmul.f32 %v71, %v71
    %v92 = vmul.f32 %v72, %v72
    %v93 = vmul.f32 %v73, %v73
    %v94 = vmul.f32 %v74, %v74
    %v95 = vmul.f32 %v75, %v75
    %v96 = vmul.f32 %v76, %v76
    %v97 = vadd.f32 %v89, %v90
    %98 = vadd.xlane.f32.xlu0 %v97
    %v99 = vpop.xlane.xlu0 %98
    %v100 = vadd.f32 %v91, %v92
    %101 = vadd.xlane.f32.xlu0 %v100
    %v102 = vpop.xlane.xlu0 %101
    %v103 = vadd.f32 %v93, %v94
    %104 = vadd.xlane.f32.xlu0 %v103
    %v105 = vpop.xlane.xlu0 %104
    %v106 = vadd.f32 %v95, %v96
    %107 = vadd.xlane.f32.xlu0 %v106
    %v108 = vpop.xlane.xlu0 %107
    %v113 = vlaneseq
    %v114 = vand.u32 %v113, 127
    %v115 = vlaneseq
    %v116 = vshrl.u32 %v115, 7
    %v117 = vsub.s32 %v114, %v116
    %v118 = vrot.slane %v79, %v117
    %v119 = vadd.s32 %v114, 4294967288
    %v120 = vlaneseq
    %v121 = vshrl.u32 %v120, 7
    %v122 = vsub.s32 %v119, %v121
    %v123 = vrot.slane %v82, %v122
    %vm124 = vcmask 130112
    %v125 = vsel %vm124, %v123, %v118
    %v126 = vlaneseq
    %v127 = vshrl.u32 %v126, 7
    %v128 = vsub.s32 %v114, %v127
    %v129 = vrot.slane %v85, %v128
    %v130 = vlaneseq
    %v131 = vshrl.u32 %v130, 7
    %v132 = vsub.s32 %v119, %v131
    %v133 = vrot.slane %v88, %v132
    %v134 = vsel %vm124, %v133, %v129
    %vm135 = vcmask 1041409
    %v136 = vsel %vm135, %v134, %v125
    %v142 = vlaneseq
    %v143 = vshrl.u32 %v142, 7
    %v144 = vsub.s32 %v114, %v143
    %v145 = vrot.slane %v99, %v144
    %v146 = vlaneseq
    %v147 = vshrl.u32 %v146, 7
    %v148 = vsub.s32 %v119, %v147
    %v149 = vrot.slane %v102, %v148
    %v150 = vsel %vm124, %v149, %v145
    %v151 = vlaneseq
    %v152 = vshrl.u32 %v151, 7
    %v153 = vsub.s32 %v114, %v152
    %v154 = vrot.slane %v105, %v153
    %v155 = vlaneseq
    %v156 = vshrl.u32 %v155, 7
    %v157 = vsub.s32 %v119, %v156
    %v158 = vrot.slane %v108, %v157
    %v159 = vsel %vm124, %v158, %v154
    %vm160 = vcmask 1043459
    %v161 = vsel %vm160, %v159, %v150
    %vm163 = vcmask 1041408
    %v164 = vsel %vm163, %v136, %v161
    %v165 = vld [vmem:[#allocation5] sm:$0xff]
    %v166 = vld [vmem:[#allocation5 + $0x8] sm:$0xff]
    %vm167 = vcmask 130048
    %v169 = vsel %vm167, %v164, 0
    %171 = vmatprep.subr.mxu0 0.0
    %172 = vmatpush1.msra.mxu0 %v165
    %173 = vmatprep.subr.mxu0 0.0
    %174 = vmatpush1.msra.mxu0 %v166
    %175 = vmatprep.subr.mxu0 0.0
    %176 = vmatpush1.msra.mxu0 0.0
    %177 = vmatprep.subr.mxu0 0.0
    %178 = vmatpush1.msra.mxu0 0.0
    %179 = vmatprep.subr.mxu0 0.0
    %180 = vmatpush1.msra.mxu0 0.0
    %181 = vmatprep.subr.mxu0 0.0
    %182 = vmatpush1.msra.mxu0 0.0
    %183 = vmatprep.subr.mxu0 0.0
    %184 = vmatpush1.msra.mxu0 0.0
    %185 = vmatprep.subr.mxu0 0.0
    %186 = vmatpush1.msra.mxu0 0.0
    %187 = vmatprep.subr.mxu0 0.0
    %188 = vmatpush1.msra.mxu0 0.0
    %189 = vmatprep.subr.mxu0 0.0
    %190 = vmatpush1.msra.mxu0 0.0
    %191 = vmatprep.subr.mxu0 0.0
    %192 = vmatpush1.msra.mxu0 0.0
    %193 = vmatprep.subr.mxu0 0.0
    %194 = vmatpush1.msra.mxu0 0.0
    %195 = vmatprep.subr.mxu0 0.0
    %196 = vmatpush1.msra.mxu0 0.0
    %197 = vmatprep.subr.mxu0 0.0
    %198 = vmatpush1.msra.mxu0 0.0
    %199 = vmatprep.subr.mxu0 0.0
    %200 = vmatpush1.msra.mxu0 0.0
    %201 = vmatprep.subr.mxu0 0.0
    %202 = vmatpush1.msra.mxu0 0.0
    %203 = vmatprep.subr.mxu0 0.0
    %204 = vmatpush1.msra.mxu0 0.0
    %205 = vmatprep.subr.mxu0 0.0
    %206 = vmatpush1.msra.mxu0 0.0
    %207 = vmatprep.subr.mxu0 0.0
    %208 = vmatpush1.msra.mxu0 0.0
    %209 = vmatprep.subr.mxu0 0.0
    %210 = vmatpush1.msra.mxu0 0.0
    %211 = vmatprep.subr.mxu0 0.0
    %212 = vmatpush1.msra.mxu0 0.0
    %213 = vmatprep.subr.mxu0 0.0
    %214 = vmatpush1.msra.mxu0 0.0
    %215 = vmatprep.subr.mxu0 0.0
    %216 = vmatpush1.msra.mxu0 0.0
    %217 = vmatprep.subr.mxu0 0.0
    %218 = vmatpush1.msra.mxu0 0.0
    %219 = vmatprep.subr.mxu0 0.0
    %220 = vmatpush1.msra.mxu0 0.0
    %221 = vmatprep.subr.mxu0 0.0
    %222 = vmatpush1.msra.mxu0 0.0
    %223 = vmatprep.subr.mxu0 0.0
    %224 = vmatpush1.msra.mxu0 0.0
    %225 = vmatprep.subr.mxu0 0.0
    %226 = vmatpush1.msra.mxu0 0.0
    %227 = vmatprep.subr.mxu0 0.0
    %228 = vmatpush1.msra.mxu0 0.0
    %229 = vmatprep.subr.mxu0 0.0
    %230 = vmatpush1.msra.mxu0 0.0
    %231 = vmatprep.subr.mxu0 0.0
    %232 = vmatpush1.msra.mxu0 0.0
    %233 = vmatprep.subr.mxu0 0.0
    %234 = vmatpush1.msra.mxu0 0.0
    %235 = vmatprep.mubr.f32.mxu0 0.0
    %236 = vmatmul.mubr.f32.gmra.mrb[0].mxu0 %v169
    %v237 = vpop.f32.mrb[0].mxu0
    %v238 = vadd.f32 0.0, %v237
    %v239 = vpop.f32.mrb[0].mxu0
    %240 = vdwg.mxu0
    %v241 = vld [vmem:[#allocation7] sm:$0xf]
    %vm242 = vcmask 31744
    %v244 = vsel %vm242, %v238, 0
    %vm246 = vcmask 1043456
    %v248 = vsel %vm246, %v241, 0
    %250 = vmatprep.subr.mxu0 0.0
    %251 = vmatpush1.msra.mxu0 %v248
    %252 = vmatprep.subr.mxu0 0.0
    %253 = vmatpush1.msra.mxu0 0.0
    %254 = vmatprep.subr.mxu0 0.0
    %255 = vmatpush1.msra.mxu0 0.0
    %256 = vmatprep.subr.mxu0 0.0
    %257 = vmatpush1.msra.mxu0 0.0
    %258 = vmatprep.subr.mxu0 0.0
    %259 = vmatpush1.msra.mxu0 0.0
    %260 = vmatprep.subr.mxu0 0.0
    %261 = vmatpush1.msra.mxu0 0.0
    %262 = vmatprep.subr.mxu0 0.0
    %263 = vmatpush1.msra.mxu0 0.0
    %264 = vmatprep.subr.mxu0 0.0
    %265 = vmatpush1.msra.mxu0 0.0
    %266 = vmatprep.subr.mxu0 0.0
    %267 = vmatpush1.msra.mxu0 0.0
    %268 = vmatprep.subr.mxu0 0.0
    %269 = vmatpush1.msra.mxu0 0.0
    %270 = vmatprep.subr.mxu0 0.0
    %271 = vmatpush1.msra.mxu0 0.0
    %272 = vmatprep.subr.mxu0 0.0
    %273 = vmatpush1.msra.mxu0 0.0
    %274 = vmatprep.subr.mxu0 0.0
    %275 = vmatpush1.msra.mxu0 0.0
    %276 = vmatprep.subr.mxu0 0.0
    %277 = vmatpush1.msra.mxu0 0.0
    %278 = vmatprep.subr.mxu0 0.0
    %279 = vmatpush1.msra.mxu0 0.0
    %280 = vmatprep.subr.mxu0 0.0
    %281 = vmatpush1.msra.mxu0 0.0
    %282 = vmatprep.subr.mxu0 0.0
    %283 = vmatpush1.msra.mxu0 0.0
    %284 = vmatprep.subr.mxu0 0.0
    %285 = vmatpush1.msra.mxu0 0.0
    %286 = vmatprep.subr.mxu0 0.0
    %287 = vmatpush1.msra.mxu0 0.0
    %288 = vmatprep.subr.mxu0 0.0
    %289 = vmatpush1.msra.mxu0 0.0
    %290 = vmatprep.subr.mxu0 0.0
    %291 = vmatpush1.msra.mxu0 0.0
    %292 = vmatprep.subr.mxu0 0.0
    %293 = vmatpush1.msra.mxu0 0.0
    %294 = vmatprep.subr.mxu0 0.0
    %295 = vmatpush1.msra.mxu0 0.0
    %296 = vmatprep.subr.mxu0 0.0
    %297 = vmatpush1.msra.mxu0 0.0
    %298 = vmatprep.subr.mxu0 0.0
    %299 = vmatpush1.msra.mxu0 0.0
    %300 = vmatprep.subr.mxu0 0.0
    %301 = vmatpush1.msra.mxu0 0.0
    %302 = vmatprep.subr.mxu0 0.0
    %303 = vmatpush1.msra.mxu0 0.0
    %304 = vmatprep.subr.mxu0 0.0
    %305 = vmatpush1.msra.mxu0 0.0
    %306 = vmatprep.subr.mxu0 0.0
    %307 = vmatpush1.msra.mxu0 0.0
    %308 = vmatprep.subr.mxu0 0.0
    %309 = vmatpush1.msra.mxu0 0.0
    %310 = vmatprep.subr.mxu0 0.0
    %311 = vmatpush1.msra.mxu0 0.0
    %312 = vmatprep.subr.mxu0 0.0
    %313 = vmatpush1.msra.mxu0 0.0
    %314 = vmatprep.mubr.f32.mxu0 0.0
    %315 = vmatmul.mubr.f32.gmra.mrb[0].mxu0 %v244
    %v316 = vpop.f32.mrb[0].mxu0
    %v317 = vadd.f32 0.0, %v316
    %v318 = vpop.f32.mrb[0].mxu0
    %319 = vdwg.mxu0
    %v320 = vmul.f32 %v317, 0.0009765625
    %v321 = vmul.f32 %v320, 1024.0
    %v322 = vmul.f32 %v321, %v320
    %v324 = vrot.slane %v322, 6
    %v326 = vsub.f32 %v317, %v324
    %v327 = vmul.f32 %v326, 0.0009775171
    %v328 = vmax.f32 %v327, 0.0
    %v329 = vrsqrt.pop %v328
    %v330 = vmul.f32 %v328, %v329
    %vm331 = vcmp.eq.f32.partialorder %v328, inf
    %v332 = vsel %vm331, %v328, %v330
    %vm333 = vcmp.eq.f32.partialorder %v328, 0.0
    %v334 = vand.u32 %v328, 2147483648
    %v335 = vsel %vm333, %v334, %v332
    %v336 = vadd.f32 %v335, 1e-10
    %v337 = vrcp.pop %v336
    %v338 = vld [vmem:[#allocation8] sm:$0x1]
    %v339 = vld [vmem:[#allocation8 + $0x1] sm:$0x1]
    %v340 = vlaneseq
    %v341 = vshrl.u32 %v340, 7
    %v342 = vsub.s32 0, %v341
    %v343 = vrot.slane %v338, %v342
    %v344 = vmul.f32 %v337, %v343
    %v346 = vrot.slane %v344, 2
    %v348 = vmul.f32 %v320, %v346
    %v349 = vlaneseq
    %v350 = vshrl.u32 %v349, 7
    %v351 = vsub.s32 0, %v350
    %v352 = vrot.slane %v339, %v351
    %v353 = vsub.f32 %v352, %v348
    %v354 = vlaneseq
    %v355 = vshrl.u32 %v354, 7
    %v356 = vsub.s32 2, %v355
    %v357 = vrot.slane %v344, %v356
    %359 = vbcast.lane.b32.xlu0 %v357, 256
    %v360 = vpop.permute.xlu0 %359
    %s362 = sor.u32 256, 8
    %363 = vbcast.lane.b32.xlu0 %v357, %s362
    %v364 = vpop.permute.xlu0 %363
    %v365 = vlaneseq
    %v366 = vshrl.u32 %v365, 7
    %v367 = vsub.s32 3, %v366
    %v368 = vrot.slane %v344, %v367
    %370 = vbcast.lane.b32.xlu0 %v368, 256
    %v371 = vpop.permute.xlu0 %370
    %s373 = sor.u32 256, 8
    %374 = vbcast.lane.b32.xlu0 %v368, %s373
    %v375 = vpop.permute.xlu0 %374
    %v376 = vlaneseq
    %v377 = vshrl.u32 %v376, 7
    %v378 = vsub.s32 0, %v377
    %v379 = vrot.slane %v353, %v378
    %381 = vbcast.lane.b32.xlu0 %v379, 256
    %v382 = vpop.permute.xlu0 %381
    %s384 = sor.u32 256, 8
    %385 = vbcast.lane.b32.xlu0 %v379, %s384
    %v386 = vpop.permute.xlu0 %385
    %v387 = vlaneseq
    %v388 = vshrl.u32 %v387, 7
    %v389 = vsub.s32 1, %v388
    %v390 = vrot.slane %v353, %v389
    %392 = vbcast.lane.b32.xlu0 %v390, 256
    %v393 = vpop.permute.xlu0 %392
    %s395 = sor.u32 256, 8
    %396 = vbcast.lane.b32.xlu0 %v390, %s395
    %v397 = vpop.permute.xlu0 %396
    %v398 = vmul.f32 %v69, %v360
    %v399 = vmul.f32 %v70, %v360
    %v400 = vmul.f32 %v71, %v364
    %v401 = vmul.f32 %v72, %v364
    %v402 = vmul.f32 %v73, %v371
    %v403 = vmul.f32 %v74, %v371
    %v404 = vmul.f32 %v75, %v375
    %v405 = vmul.f32 %v76, %v375
    %v406 = vadd.f32 %v398, %v382
    %v407 = vadd.f32 %v399, %v382
    %v408 = vadd.f32 %v400, %v386
    %v409 = vadd.f32 %v401, %v386
    %v410 = vadd.f32 %v402, %v393
    %v411 = vadd.f32 %v403, %v393
    %v412 = vadd.f32 %v404, %v397
    %v413 = vadd.f32 %v405, %v397
    %414 = vst [vmem:[#allocation10] sm:$0xff] %v406
    %415 = vst [vmem:[#allocation10 + $0x8] sm:$0xff] %v407
    %416 = vst [vmem:[#allocation10 + $0x10] sm:$0xff] %v408
    %417 = vst [vmem:[#allocation10 + $0x18] sm:$0xff] %v409
    %418 = vst [vmem:[#allocation10 + $0x20] sm:$0xff] %v410
    %419 = vst [vmem:[#allocation10 + $0x28] sm:$0xff] %v411
    %420 = vst [vmem:[#allocation10 + $0x30] sm:$0xff] %v412
    %421 = vst [vmem:[#allocation10 + $0x38] sm:$0xff] %v413
    // Predicated region
    $region34: #{tpu_custom_call.1} parent=1 // pred_check
      _
    $region35: #{tpu_custom_call.1} parent=1 // pred_check_branch
      %423 = sbr.rel (0) target = $region37
    $region36: #{tpu_custom_call.1} parent=1 // pred_region
      %s425 = ssub.s32 1024, 1024
      %426 = vsyncadd [#allocation4], %s425
      %s427 = sshll.u32 [#allocation10], 4
      %s428 = int_to_ptr.vmem [resolvable:$true] %s427
      %433 = dma.vmem_to_hbm [thread:$0]  %s428, 1024, %s4, [#allocation4], 256, 256, 16
    $region37: #{tpu_custom_call.1} parent=1 // pred_fallthru
      _
    // Predicated region
    $region38: #{tpu_custom_call.1} parent=1 // pred_check
      _
    $region39: #{tpu_custom_call.1} parent=1 // pred_check_branch
      %435 = sbr.rel (0) target = $region41
    $region40: #{tpu_custom_call.1} parent=1 // pred_region
      %436 = dma.done [#allocation4], 1024
    $region41: #{tpu_custom_call.1} parent=1 // pred_fallthru
      _
    %437 = vsyncpa [#allocation3], 1
    %438 = vsyncpa [#allocation6], 1
    %439 = vsyncpa [#allocation9], 1
    %440 = vsyncpa [#allocation4], 1

// kernel: tpu_custom_call.1
$region0: #{tpu_custom_call.1}
  #allocation0 [shape = 'u32[]', space=smem, size = 0x4, offset = 0x4, fixed_abs, tag = 'smem constant byte address 0x4 - core index']
  #allocation1 [shape = 'u32[144,128]{1,0:T(1,128)}', space=vmem, size = 0x12000, scoped, tag = 'internal scratch']
  %s0 = inlined_call_operand.hbm [shape: f32[2,16,256], index: 0, kind: input, shape index: {}]
  %s1 = inlined_call_operand.hbm [shape: f32[16,4], index: 1, kind: input, shape index: {}]
  %s2 = inlined_call_operand.hbm [shape: f32[4,16], index: 2, kind: input, shape index: {}]
  %s3 = inlined_call_operand.hbm [shape: f32[2,16], index: 3, kind: input, shape index: {}]
  %s4 = inlined_call_operand.hbm [shape: f32[2,16,256], index: 4, kind: output, shape index: {}]
  %s5 = sld [smem:[#allocation0]]
  $region42: #{tpu_custom_call.1} parent=0
    _
  %s7 = ssub.s32 1, %s5
  %s8 = scalar_select 0, %s7, %s5
  $region1: #{tpu_custom_call.1} parent=0
    #allocation2 [shape = 'u8[32768]{0}', space=vmem, size = 0x8000, scoped, tag = 'input window, operand 0, single buffered']
    #allocation3 [shape = 's32[1]{0}', space=sflag, size = 0x4, scoped, tag = 'scoped memory for tpu_custom_call.1']
    #allocation4 [shape = 's32[1]{0}', space=sflag, size = 0x4, scoped, tag = 'scoped memory for tpu_custom_call.1']
    #allocation5 [shape = 'u8[8192]{0}', space=vmem, size = 0x2000, scoped, tag = 'input window, operand 1, single buffered']
    #allocation6 [shape = 's32[1]{0}', space=sflag, size = 0x4, scoped, tag = 'scoped memory for tpu_custom_call.1']
    #allocation7 [shape = 'u8[2048]{0}', space=vmem, size = 0x800, scoped, tag = 'input window, operand 2, single buffered']
    #allocation8 [shape = 'u8[1024]{0}', space=vmem, size = 0x400, scoped, tag = 'input window, operand 3, single buffered']
    #allocation9 [shape = 's32[1]{0}', space=sflag, size = 0x4, scoped, tag = 'scoped memory for tpu_custom_call.1']
    #allocation10 [shape = 'u8[32768]{0}', space=vmem, size = 0x8000, scoped, tag = 'output window, operand 0, single buffered']
    %9 = vsyncpa [#allocation3], 0
    %10 = vsyncpa [#allocation6], 0
    %11 = vsyncpa [#allocation9], 0
    %12 = vsyncpa [#allocation4], 0
    // Predicated region
    $region2: #{tpu_custom_call.1} parent=1 // pred_check
      _
    $region3: #{tpu_custom_call.1} parent=1 // pred_check_branch
      %14 = sbr.rel (0) target = $region5
    $region4: #{tpu_custom_call.1} parent=1 // pred_region
      %s16 = ssub.s32 1024, 1024
      %17 = vsyncadd [#allocation3], %s16
      %s18 = sshll.u32 [#allocation2], 4
      %s19 = int_to_ptr.vmem [resolvable:$true] %s18
      %24 = dma.hbm_to_vmem [thread:$0]  %s0, 1024, %s19, [#allocation3], 256, 256, 16
    $region5: #{tpu_custom_call.1} parent=1 // pred_fallthru
      _
    // Predicated region
    $region6: #{tpu_custom_call.1} parent=1 // pred_check
      _
    $region7: #{tpu_custom_call.1} parent=1 // pred_check_branch
      %26 = sbr.rel (0) target = $region9
    $region8: #{tpu_custom_call.1} parent=1 // pred_region
      %s28 = ssub.s32 256, 256
      %29 = vsyncadd [#allocation6], %s28
      %s30 = sshll.u32 [#allocation5], 4
      %s31 = int_to_ptr.vmem [resolvable:$true] %s30
      %36 = dma.hbm_to_vmem [thread:$0]  %s1, 256, %s31, [#allocation6], 128, 128, 8
    $region9: #{tpu_custom_call.1} parent=1 // pred_fallthru
      _
    // Predicated region
    $region10: #{tpu_custom_call.1} parent=1 // pred_check
      _
    $region11: #{tpu_custom_call.1} parent=1 // pred_check_branch
      %38 = sbr.rel (0) target = $region13
    $region12: #{tpu_custom_call.1} parent=1 // pred_region
      %s40 = ssub.s32 64, 64
      %41 = vsyncadd [#allocation6], %s40
      %s43 = sshll.u32 [#allocation7], 4
      %s44 = int_to_ptr.vmem [resolvable:$true] %s43
      %46 = dma.hbm_to_vmem [thread:$0]  %s2, 64, %s44, [#allocation6]
    $region13: #{tpu_custom_call.1} parent=1 // pred_fallthru
      _
    // Predicated region
    $region14: #{tpu_custom_call.1} parent=1 // pred_check
      _
    $region15: #{tpu_custom_call.1} parent=1 // pred_check_branch
      %48 = sbr.rel (0) target = $region17
    $region16: #{tpu_custom_call.1} parent=1 // pred_region
      %s50 = ssub.s32 32, 32
      %51 = vsyncadd [#allocation9], %s50
      %s53 = sshll.u32 [#allocation8], 4
      %s54 = int_to_ptr.vmem [resolvable:$true] %s53
      %56 = dma.hbm_to_vmem [thread:$0]  %s3, 32, %s54, [#allocation9]
    $region17: #{tpu_custom_call.1} parent=1 // pred_fallthru
      _
    // Predicated region
    $region18: #{tpu_custom_call.1} parent=1 // pred_check
      _
    $region19: #{tpu_custom_call.1} parent=1 // pred_check_branch
      %58 = sbr.rel (0) target = $region21
    $region20: #{tpu_custom_call.1} parent=1 // pred_region
      %59 = dma.done [#allocation3], 1024
    $region21: #{tpu_custom_call.1} parent=1 // pred_fallthru
      _
    // Predicated region
    $region22: #{tpu_custom_call.1} parent=1 // pred_check
      _
    $region23: #{tpu_custom_call.1} parent=1 // pred_check_branch
      %61 = sbr.rel (0) target = $region25
    $region24: #{tpu_custom_call.1} parent=1 // pred_region
      %62 = dma.done [#allocation6], 256
    $region25: #{tpu_custom_call.1} parent=1 // pred_fallthru
      _
    // Predicated region
    $region26: #{tpu_custom_call.1} parent=1 // pred_check
      _
    $region27: #{tpu_custom_call.1} parent=1 // pred_check_branch
      %64 = sbr.rel (0) target = $region29
    $region28: #{tpu_custom_call.1} parent=1 // pred_region
      %65 = dma.done [#allocation6], 64
    $region29: #{tpu_custom_call.1} parent=1 // pred_fallthru
      _
    // Predicated region
    $region30: #{tpu_custom_call.1} parent=1 // pred_check
      _
    $region31: #{tpu_custom_call.1} parent=1 // pred_check_branch
      %67 = sbr.rel (0) target = $region33
    $region32: #{tpu_custom_call.1} parent=1 // pred_region
      %68 = dma.done [#allocation9], 32
    $region33: #{tpu_custom_call.1} parent=1 // pred_fallthru
      _
    %v69 = vld [vmem:[#allocation2] sm:$0xff]
    %v70 = vld [vmem:[#allocation2 + $0x8] sm:$0xff]
    %v71 = vld [vmem:[#allocation2 + $0x10] sm:$0xff]
    %v72 = vld [vmem:[#allocation2 + $0x18] sm:$0xff]
    %v73 = vld [vmem:[#allocation2 + $0x20] sm:$0xff]
    %v74 = vld [vmem:[#allocation2 + $0x28] sm:$0xff]
    %v75 = vld [vmem:[#allocation2 + $0x30] sm:$0xff]
    %v76 = vld [vmem:[#allocation2 + $0x38] sm:$0xff]
    %v77 = vadd.f32 %v69, %v70
    %78 = vadd.xlane.f32.xlu0 %v77
    %v79 = vpop.xlane.xlu0 %78
    %v80 = vadd.f32 %v71, %v72
    %81 = vadd.xlane.f32.xlu0 %v80
    %v82 = vpop.xlane.xlu0 %81
    %v83 = vadd.f32 %v73, %v74
    %84 = vadd.xlane.f32.xlu0 %v83
    %v85 = vpop.xlane.xlu0 %84
    %v86 = vadd.f32 %v75, %v76
    %87 = vadd.xlane.f32.xlu0 %v86
    %v88 = vpop.xlane.xlu0 %87
    %v89 = vmul.f32 %v69, %v69
    %v90 = vmul.f32 %v70, %v70
    %v91 = vmul.f32 %v71, %v71
    %v92 = vmul.f32 %v72, %v72
    %v93 = vmul.f32 %v73, %v73
    %v94 = vmul.f32 %v74, %v74
    %v95 = vmul.f32 %v75, %v75
    %v96 = vmul.f32 %v76, %v76
    %v97 = vadd.f32 %v89, %v90
    %98 = vadd.xlane.f32.xlu0 %v97
    %v99 = vpop.xlane.xlu0 %98
    %v100 = vadd.f32 %v91, %v92
    %101 = vadd.xlane.f32.xlu0 %v100
    %v102 = vpop.xlane.xlu0 %101
    %v103 = vadd.f32 %v93, %v94
    %104 = vadd.xlane.f32.xlu0 %v103
    %v105 = vpop.xlane.xlu0 %104
    %v106 = vadd.f32 %v95, %v96
    %107 = vadd.xlane.f32.xlu0 %v106
    %v108 = vpop.xlane.xlu0 %107
    %v113 = vlaneseq
    %v114 = vand.u32 %v113, 127
    %v115 = vlaneseq
    %v116 = vshrl.u32 %v115, 7
    %v117 = vsub.s32 %v114, %v116
    %v118 = vrot.slane %v79, %v117
    %v119 = vadd.s32 %v114, 4294967288
    %v120 = vlaneseq
    %v121 = vshrl.u32 %v120, 7
    %v122 = vsub.s32 %v119, %v121
    %v123 = vrot.slane %v82, %v122
    %vm124 = vcmask 130112
    %v125 = vsel %vm124, %v123, %v118
    %v126 = vlaneseq
    %v127 = vshrl.u32 %v126, 7
    %v128 = vsub.s32 %v114, %v127
    %v129 = vrot.slane %v85, %v128
    %v130 = vlaneseq
    %v131 = vshrl.u32 %v130, 7
    %v132 = vsub.s32 %v119, %v131
    %v133 = vrot.slane %v88, %v132
    %v134 = vsel %vm124, %v133, %v129
    %vm135 = vcmask 1041409
    %v136 = vsel %vm135, %v134, %v125
    %v142 = vlaneseq
    %v143 = vshrl.u32 %v142, 7
    %v144 = vsub.s32 %v114, %v143
    %v145 = vrot.slane %v99, %v144
    %v146 = vlaneseq
    %v147 = vshrl.u32 %v146, 7
    %v148 = vsub.s32 %v119, %v147
    %v149 = vrot.slane %v102, %v148
    %v150 = vsel %vm124, %v149, %v145
    %v151 = vlaneseq
    %v152 = vshrl.u32 %v151, 7
    %v153 = vsub.s32 %v114, %v152
    %v154 = vrot.slane %v105, %v153
    %v155 = vlaneseq
    %v156 = vshrl.u32 %v155, 7
    %v157 = vsub.s32 %v119, %v156
    %v158 = vrot.slane %v108, %v157
    %v159 = vsel %vm124, %v158, %v154
    %vm160 = vcmask 1043459
    %v161 = vsel %vm160, %v159, %v150
    %vm163 = vcmask 1041408
    %v164 = vsel %vm163, %v136, %v161
    %v165 = vld [vmem:[#allocation5] sm:$0xff]
    %v166 = vld [vmem:[#allocation5 + $0x8] sm:$0xff]
    %vm167 = vcmask 130048
    %v169 = vsel %vm167, %v164, 0
    %171 = vmatprep.subr.mxu0 0.0
    %172 = vmatpush1.msra.mxu0 %v165
    %173 = vmatprep.subr.mxu0 0.0
    %174 = vmatpush1.msra.mxu0 %v166
    %175 = vmatprep.subr.mxu0 0.0
    %176 = vmatpush1.msra.mxu0 0.0
    %177 = vmatprep.subr.mxu0 0.0
    %178 = vmatpush1.msra.mxu0 0.0
    %179 = vmatprep.subr.mxu0 0.0
    %180 = vmatpush1.msra.mxu0 0.0
    %181 = vmatprep.subr.mxu0 0.0
    %182 = vmatpush1.msra.mxu0 0.0
    %183 = vmatprep.subr.mxu0 0.0
    %184 = vmatpush1.msra.mxu0 0.0
    %185 = vmatprep.subr.mxu0 0.0
    %186 = vmatpush1.msra.mxu0 0.0
    %187 = vmatprep.subr.mxu0 0.0
    %188 = vmatpush1.msra.mxu0 0.0
    %189 = vmatprep.subr.mxu0 0.0
    %190 = vmatpush1.msra.mxu0 0.0
    %191 = vmatprep.subr.mxu0 0.0
    %192 = vmatpush1.msra.mxu0 0.0
    %193 = vmatprep.subr.mxu0 0.0
    %194 = vmatpush1.msra.mxu0 0.0
    %195 = vmatprep.subr.mxu0 0.0
    %196 = vmatpush1.msra.mxu0 0.0
    %197 = vmatprep.subr.mxu0 0.0
    %198 = vmatpush1.msra.mxu0 0.0
    %199 = vmatprep.subr.mxu0 0.0
    %200 = vmatpush1.msra.mxu0 0.0
    %201 = vmatprep.subr.mxu0 0.0
    %202 = vmatpush1.msra.mxu0 0.0
    %203 = vmatprep.subr.mxu0 0.0
    %204 = vmatpush1.msra.mxu0 0.0
    %205 = vmatprep.subr.mxu0 0.0
    %206 = vmatpush1.msra.mxu0 0.0
    %207 = vmatprep.subr.mxu0 0.0
    %208 = vmatpush1.msra.mxu0 0.0
    %209 = vmatprep.subr.mxu0 0.0
    %210 = vmatpush1.msra.mxu0 0.0
    %211 = vmatprep.subr.mxu0 0.0
    %212 = vmatpush1.msra.mxu0 0.0
    %213 = vmatprep.subr.mxu0 0.0
    %214 = vmatpush1.msra.mxu0 0.0
    %215 = vmatprep.subr.mxu0 0.0
    %216 = vmatpush1.msra.mxu0 0.0
    %217 = vmatprep.subr.mxu0 0.0
    %218 = vmatpush1.msra.mxu0 0.0
    %219 = vmatprep.subr.mxu0 0.0
    %220 = vmatpush1.msra.mxu0 0.0
    %221 = vmatprep.subr.mxu0 0.0
    %222 = vmatpush1.msra.mxu0 0.0
    %223 = vmatprep.subr.mxu0 0.0
    %224 = vmatpush1.msra.mxu0 0.0
    %225 = vmatprep.subr.mxu0 0.0
    %226 = vmatpush1.msra.mxu0 0.0
    %227 = vmatprep.subr.mxu0 0.0
    %228 = vmatpush1.msra.mxu0 0.0
    %229 = vmatprep.subr.mxu0 0.0
    %230 = vmatpush1.msra.mxu0 0.0
    %231 = vmatprep.subr.mxu0 0.0
    %232 = vmatpush1.msra.mxu0 0.0
    %233 = vmatprep.subr.mxu0 0.0
    %234 = vmatpush1.msra.mxu0 0.0
    %235 = vmatprep.mubr.f32.mxu0 0.0
    %236 = vmatmul.mubr.f32.gmra.mrb[0].mxu0 %v169
    %v237 = vpop.f32.mrb[0].mxu0
    %v238 = vadd.f32 0.0, %v237
    %v239 = vpop.f32.mrb[0].mxu0
    %240 = vdwg.mxu0
    %v241 = vld [vmem:[#allocation7] sm:$0xf]
    %vm242 = vcmask 31744
    %v244 = vsel %vm242, %v238, 0
    %vm246 = vcmask 1043456
    %v248 = vsel %vm246, %v241, 0
    %250 = vmatprep.subr.mxu0 0.0
    %251 = vmatpush1.msra.mxu0 %v248
    %252 = vmatprep.subr.mxu0 0.0
    %253 = vmatpush1.msra.mxu0 0.0
    %254 = vmatprep.subr.mxu0 0.0
    %255 = vmatpush1.msra.mxu0 0.0
    %256 = vmatprep.subr.mxu0 0.0
    %257 = vmatpush1.msra.mxu0 0.0
    %258 = vmatprep.subr.mxu0 0.0
    %259 = vmatpush1.msra.mxu0 0.0
    %260 = vmatprep.subr.mxu0 0.0
    %261 = vmatpush1.msra.mxu0 0.0
    %262 = vmatprep.subr.mxu0 0.0
    %263 = vmatpush1.msra.mxu0 0.0
    %264 = vmatprep.subr.mxu0 0.0
    %265 = vmatpush1.msra.mxu0 0.0
    %266 = vmatprep.subr.mxu0 0.0
    %267 = vmatpush1.msra.mxu0 0.0
    %268 = vmatprep.subr.mxu0 0.0
    %269 = vmatpush1.msra.mxu0 0.0
    %270 = vmatprep.subr.mxu0 0.0
    %271 = vmatpush1.msra.mxu0 0.0
    %272 = vmatprep.subr.mxu0 0.0
    %273 = vmatpush1.msra.mxu0 0.0
    %274 = vmatprep.subr.mxu0 0.0
    %275 = vmatpush1.msra.mxu0 0.0
    %276 = vmatprep.subr.mxu0 0.0
    %277 = vmatpush1.msra.mxu0 0.0
    %278 = vmatprep.subr.mxu0 0.0
    %279 = vmatpush1.msra.mxu0 0.0
    %280 = vmatprep.subr.mxu0 0.0
    %281 = vmatpush1.msra.mxu0 0.0
    %282 = vmatprep.subr.mxu0 0.0
    %283 = vmatpush1.msra.mxu0 0.0
    %284 = vmatprep.subr.mxu0 0.0
    %285 = vmatpush1.msra.mxu0 0.0
    %286 = vmatprep.subr.mxu0 0.0
    %287 = vmatpush1.msra.mxu0 0.0
    %288 = vmatprep.subr.mxu0 0.0
    %289 = vmatpush1.msra.mxu0 0.0
    %290 = vmatprep.subr.mxu0 0.0
    %291 = vmatpush1.msra.mxu0 0.0
    %292 = vmatprep.subr.mxu0 0.0
    %293 = vmatpush1.msra.mxu0 0.0
    %294 = vmatprep.subr.mxu0 0.0
    %295 = vmatpush1.msra.mxu0 0.0
    %296 = vmatprep.subr.mxu0 0.0
    %297 = vmatpush1.msra.mxu0 0.0
    %298 = vmatprep.subr.mxu0 0.0
    %299 = vmatpush1.msra.mxu0 0.0
    %300 = vmatprep.subr.mxu0 0.0
    %301 = vmatpush1.msra.mxu0 0.0
    %302 = vmatprep.subr.mxu0 0.0
    %303 = vmatpush1.msra.mxu0 0.0
    %304 = vmatprep.subr.mxu0 0.0
    %305 = vmatpush1.msra.mxu0 0.0
    %306 = vmatprep.subr.mxu0 0.0
    %307 = vmatpush1.msra.mxu0 0.0
    %308 = vmatprep.subr.mxu0 0.0
    %309 = vmatpush1.msra.mxu0 0.0
    %310 = vmatprep.subr.mxu0 0.0
    %311 = vmatpush1.msra.mxu0 0.0
    %312 = vmatprep.subr.mxu0 0.0
    %313 = vmatpush1.msra.mxu0 0.0
    %314 = vmatprep.mubr.f32.mxu0 0.0
    %315 = vmatmul.mubr.f32.gmra.mrb[0].mxu0 %v244
    %v316 = vpop.f32.mrb[0].mxu0
    %v317 = vadd.f32 0.0, %v316
    %v318 = vpop.f32.mrb[0].mxu0
    %319 = vdwg.mxu0
    %v320 = vmul.f32 %v317, 0.0009765625
    %v321 = vmul.f32 %v320, 1024.0
    %v322 = vmul.f32 %v321, %v320
    %v324 = vrot.slane %v322, 6
    %v326 = vsub.f32 %v317, %v324
    %v327 = vmul.f32 %v326, 0.0009775171
    %v328 = vmax.f32 %v327, 0.0
    %v329 = vrsqrt.pop %v328
    %v330 = vmul.f32 %v328, %v329
    %vm331 = vcmp.eq.f32.partialorder %v328, inf
    %v332 = vsel %vm331, %v328, %v330
    %vm333 = vcmp.eq.f32.partialorder %v328, 0.0
    %v334 = vand.u32 %v328, 2147483648
    %v335 = vsel %vm333, %v334, %v332
    %v336 = vadd.f32 %v335, 1e-10
    %v337 = vrcp.pop %v336
    %v338 = vld [vmem:[#allocation8] sm:$0x1]
    %v339 = vld [vmem:[#allocation8 + $0x1] sm:$0x1]
    %v340 = vlaneseq
    %v341 = vshrl.u32 %v340, 7
    %v342 = vsub.s32 0, %v341
    %v343 = vrot.slane %v338, %v342
    %v344 = vmul.f32 %v337, %v343
    %v346 = vrot.slane %v344, 2
    %v348 = vmul.f32 %v320, %v346
    %v349 = vlaneseq
    %v350 = vshrl.u32 %v349, 7
    %v351 = vsub.s32 0, %v350
    %v352 = vrot.slane %v339, %v351
    %v353 = vsub.f32 %v352, %v348
    %v354 = vlaneseq
    %v355 = vshrl.u32 %v354, 7
    %v356 = vsub.s32 2, %v355
    %v357 = vrot.slane %v344, %v356
    %359 = vbcast.lane.b32.xlu0 %v357, 256
    %v360 = vpop.permute.xlu0 %359
    %s362 = sor.u32 256, 8
    %363 = vbcast.lane.b32.xlu0 %v357, %s362
    %v364 = vpop.permute.xlu0 %363
    %v365 = vlaneseq
    %v366 = vshrl.u32 %v365, 7
    %v367 = vsub.s32 3, %v366
    %v368 = vrot.slane %v344, %v367
    %370 = vbcast.lane.b32.xlu0 %v368, 256
    %v371 = vpop.permute.xlu0 %370
    %s373 = sor.u32 256, 8
    %374 = vbcast.lane.b32.xlu0 %v368, %s373
    %v375 = vpop.permute.xlu0 %374
    %v376 = vlaneseq
    %v377 = vshrl.u32 %v376, 7
    %v378 = vsub.s32 0, %v377
    %v379 = vrot.slane %v353, %v378
    %381 = vbcast.lane.b32.xlu0 %v379, 256
    %v382 = vpop.permute.xlu0 %381
    %s384 = sor.u32 256, 8
    %385 = vbcast.lane.b32.xlu0 %v379, %s384
    %v386 = vpop.permute.xlu0 %385
    %v387 = vlaneseq
    %v388 = vshrl.u32 %v387, 7
    %v389 = vsub.s32 1, %v388
    %v390 = vrot.slane %v353, %v389
    %392 = vbcast.lane.b32.xlu0 %v390, 256
    %v393 = vpop.permute.xlu0 %392
    %s395 = sor.u32 256, 8
    %396 = vbcast.lane.b32.xlu0 %v390, %s395
    %v397 = vpop.permute.xlu0 %396
    %v398 = vmul.f32 %v69, %v360
    %v399 = vmul.f32 %v70, %v360
    %v400 = vmul.f32 %v71, %v364
    %v401 = vmul.f32 %v72, %v364
    %v402 = vmul.f32 %v73, %v371
    %v403 = vmul.f32 %v74, %v371
    %v404 = vmul.f32 %v75, %v375
    %v405 = vmul.f32 %v76, %v375
    %v406 = vadd.f32 %v398, %v382
    %v407 = vadd.f32 %v399, %v382
    %v408 = vadd.f32 %v400, %v386
    %v409 = vadd.f32 %v401, %v386
    %v410 = vadd.f32 %v402, %v393
    %v411 = vadd.f32 %v403, %v393
    %v412 = vadd.f32 %v404, %v397
    %v413 = vadd.f32 %v405, %v397
    %414 = vst [vmem:[#allocation10] sm:$0xff] %v406
    %415 = vst [vmem:[#allocation10 + $0x8] sm:$0xff] %v407
    %416 = vst [vmem:[#allocation10 + $0x10] sm:$0xff] %v408
    %417 = vst [vmem:[#allocation10 + $0x18] sm:$0xff] %v409
    %418 = vst [vmem:[#allocation10 + $0x20] sm:$0xff] %v410
    %419 = vst [vmem:[#allocation10 + $0x28] sm:$0xff] %v411
    %420 = vst [vmem:[#allocation10 + $0x30] sm:$0xff] %v412
    %421 = vst [vmem:[#allocation10 + $0x38] sm:$0xff] %v413
    // Predicated region
    $region34: #{tpu_custom_call.1} parent=1 // pred_check
      _
    $region35: #{tpu_custom_call.1} parent=1 // pred_check_branch
      %423 = sbr.rel (0) target = $region37
    $region36: #{tpu_custom_call.1} parent=1 // pred_region
      %s425 = ssub.s32 1024, 1024
      %426 = vsyncadd [#allocation4], %s425
      %s427 = sshll.u32 [#allocation10], 4
      %s428 = int_to_ptr.vmem [resolvable:$true] %s427
      %433 = dma.vmem_to_hbm [thread:$0]  %s428, 1024, %s4, [#allocation4], 256, 256, 16
    $region37: #{tpu_custom_call.1} parent=1 // pred_fallthru
      _
    // Predicated region
    $region38: #{tpu_custom_call.1} parent=1 // pred_check
      _
    $region39: #{tpu_custom_call.1} parent=1 // pred_check_branch
      %435 = sbr.rel (0) target = $region41
    $region40: #{tpu_custom_call.1} parent=1 // pred_region
      %436 = dma.done [#allocation4], 1024
    $region41: #{tpu_custom_call.1} parent=1 // pred_fallthru
      _
    %437 = vsyncpa [#allocation3], 1
    %438 = vsyncpa [#allocation6], 1
    %439 = vsyncpa [#allocation9], 1
    %440 = vsyncpa [#allocation4], 1

</llo_original>
